<compile_context>
chip_gen: v7x
topology: tpu7x:2x2x1
jax: 0.10.0
libtpu: 0.0.40
codegen_flags: <defaults>
</compile_context>

<pallas_src>
import functools

import jax
import jax.numpy as jnp
from jax.experimental import pallas as pl
from jax.experimental.pallas import tpu as pltpu


def _round_up(x, m):
    return ((x + m - 1) // m) * m


def _triplet_bce_kernel(scalar_ref, anc_ref, ctx_ref, rep_ref, seg_ref,
                        out_ref, acc_ref, *, tn, n_ctx, steps_per_core):
    c = pl.program_id(0)          # split ("parallel") axis
    s = pl.program_id(1)          # sequential reduction axis

    @pl.when(s == 0)
    def _():
        acc_ref[...] = jnp.zeros_like(acc_ref)

    n_pos = scalar_ref[0]         # SMEM scalar: number of positive columns
    n_valid = scalar_ref[1]       # SMEM scalar: number of valid (unpadded) rows

    anc = anc_ref[...]            # (tn, D)    bf16
    ctx = ctx_ref[...]            # (tn, K*D)  bf16, lane-dense

    # Broadcast the anchor across the K context slots on the MXU:
    # rep[d, k*D + d'] = (d == d')  ->  anc_t[n, k*D + d] = anc[n, d] (exact).
    anc_t = jnp.dot(anc, rep_ref[...],
                    preferred_element_type=jnp.float32).astype(jnp.bfloat16)
    prod = ctx * anc_t            # (tn, K*D) bf16 VPU multiply

    # Segment-sum each D-wide slot on the MXU (block-diagonal ones), f32 accum:
    # x[n, k] = sum_d prod[n, k*D + d] = <anc[n], ctx_emb[n, k]>
    x = jnp.dot(prod, seg_ref[...],
                preferred_element_type=jnp.float32)        # (tn, K) f32

    # Labels: first n_pos columns are positives (1.0), the rest negatives (0.0).
    col = jax.lax.broadcasted_iota(jnp.int32, (tn, n_ctx), 1)
    y = (col < n_pos).astype(jnp.float32)

    # Numerically stable BCE-with-logits (same formula torch uses):
    #   max(x, 0) - x*y + log(1 + exp(-|x|))
    loss = jnp.maximum(x, 0.0) - x * y + jnp.log1p(jnp.exp(-jnp.abs(x)))

    row_block = c * steps_per_core + s
    tile_start = row_block * tn
    full_tile = (tile_start + tn) <= n_valid

    @pl.when(full_tile)
    def _():                      # fast path: no padded rows in this tile
        acc_ref[...] += loss

    @pl.when(jnp.logical_not(full_tile))
    def _():                      # boundary tile: mask out padded rows
        row = tile_start + jax.lax.broadcasted_iota(jnp.int32, (tn, n_ctx), 0)
        acc_ref[...] += jnp.where(row < n_valid, loss, 0.0)

    @pl.when(s == pl.num_programs(1) - 1)
    def _():
        out_ref[...] = jnp.sum(acc_ref[...], keepdims=True)   # (1, 1)


def triplet_bce_forward(embed_table_bf16, anc, pos, neg, *,
                        tn_max=1024, n_split=1):
    """Forward of TripletBCEEmbeddingModel -> scalar BCE-with-logits loss.

    `embed_table_bf16` must already be bf16 (cast once at init, not per step).
    Use n_split=2 on v7x (2 TensorCores); keep n_split=1 on v5e/v6e.
    """
    (B,) = anc.shape
    P = pos.shape[1]
    Nn = neg.shape[1]
    K = P + Nn
    D = embed_table_bf16.shape[1]
    KD = K * D

    tbl = embed_table_bf16
    # TODO(synk): fuse these gathers into the kernel (VMEM-resident table or
    #             DMA row-gather) to kill the ctx_emb HBM round-trip.
    anc_emb = tbl[anc]                                       # (B, D)    bf16
    ctx_idx = jnp.concatenate([pos, neg], axis=1)            # (B, K)
    ctx_emb = tbl[ctx_idx].reshape(B, KD)                    # (B, K*D)  bf16

    # Constant matrices driving the MXU broadcast / segment-reduce.
    rep = jnp.tile(jnp.eye(D, dtype=jnp.bfloat16), (1, K))              # (D, K*D)
    seg = jnp.repeat(jnp.eye(K, dtype=jnp.bfloat16), D, axis=0)         # (K*D, K)

    # VMEM-aware row tile: double-buffered anc/ctx streams + accumulator +
    # in-kernel temporaries, under an explicit budget (safe on v5e/v6e/v7x).
    bytes_per_row = (2 * KD * 2          # ctx bf16, double buffered
                     + 2 * D * 2         # anc bf16, double buffered
                     + K * 4             # f32 accumulator
                     + 2 * KD * 2        # anc_t + prod temporaries (bf16-ish)
                     + 2 * K * 4)        # scores + loss temporaries (f32)
    const_bytes = 2 * (D * KD * 2 + KD * K * 2)
    vmem_budget = 24 << 20
    tn_cap = max(16, (vmem_budget - const_bytes) // bytes_per_row)
    tn = min(tn_max, tn_cap, _round_up(B, 16))
    tn = max(16, (tn // 16) * 16)        # multiple of 16 (bf16 sublane packing)

    n_pad = _round_up(B, n_split * tn)
    pad = n_pad - B
    if pad:
        anc_emb = jnp.pad(anc_emb, ((0, pad), (0, 0)))
        ctx_emb = jnp.pad(ctx_emb, ((0, pad), (0, 0)))
    steps_per_core = n_pad // (n_split * tn)

    # Runtime scalars -> SMEM (no recompile when P / B change).
    scalars = jnp.array([P, B], dtype=jnp.int32)

    kernel = functools.partial(_triplet_bce_kernel, tn=tn, n_ctx=K,
                               steps_per_core=steps_per_core)

    part_sums = pl.pallas_call(
        kernel,
        out_shape=jax.ShapeDtypeStruct((n_split, 1), jnp.float32),
        grid_spec=pltpu.PrefetchScalarGridSpec(
            num_scalar_prefetch=1,
            grid=(n_split, steps_per_core),
            in_specs=[
                pl.BlockSpec((tn, D),
                             lambda c, s, sc: (c * steps_per_core + s, 0)),
                pl.BlockSpec((tn, KD),
                             lambda c, s, sc: (c * steps_per_core + s, 0)),
                pl.BlockSpec((D, KD), lambda c, s, sc: (0, 0)),   # resident
                pl.BlockSpec((KD, K), lambda c, s, sc: (0, 0)),   # resident
            ],
            out_specs=pl.BlockSpec((1, 1), lambda c, s, sc: (c, 0)),
            scratch_shapes=[pltpu.VMEM((tn, K), jnp.float32)],
        ),
        compiler_params=pltpu.CompilerParams(
            dimension_semantics=(
                ("parallel" if n_split > 1 else "arbitrary"), "arbitrary"),
            vmem_limit_bytes=32 * 1024 * 1024),
    )(scalars, anc_emb, ctx_emb, rep, seg)

    # Each split wrote its own partial sum; combine outside, then mean.
    return jnp.sum(part_sums) / jnp.float32(B * K)


def triplet_bce_forward_ref(embed_table_bf16, anc, pos, neg):
    """Pure-JAX reference with the same mixed precision as the kernel:
    bf16 table, bf16 elementwise products, f32 accumulation/BCE."""
    tbl = embed_table_bf16
    a = tbl[anc]                                             # (B, D)    bf16
    p = tbl[pos]                                             # (B, P, D) bf16
    n = tbl[neg]                                             # (B, Nn,D) bf16
    pos_s = jnp.sum((a[:, None, :] * p).astype(jnp.float32), axis=-1)
    neg_s = jnp.sum((a[:, None, :] * n).astype(jnp.float32), axis=-1)
    x = jnp.concatenate([pos_s, neg_s], axis=1)
    y = jnp.concatenate([jnp.ones_like(pos_s), jnp.zeros_like(neg_s)], axis=1)
    loss = jnp.maximum(x, 0.0) - x * y + jnp.log1p(jnp.exp(-jnp.abs(x)))
    return jnp.mean(loss)


if __name__ == "__main__":
    # Small, deterministic problem.
    n_nodes, n_dims = 64, 32
    B, P, Nn = 8, 4, 4            # P == Nn, as the torch cat(dim=0) requires

    key = jax.random.PRNGKey(0)
    k_emb, k_anc, k_pos, k_neg = jax.random.split(key, 4)

    # nn.Embedding default init ~ N(0, 1); keep the table in bf16 persistently
    # (cast once here, never inside the training-step forward).
    embed_table = jax.random.normal(
        k_emb, (n_nodes, n_dims), dtype=jnp.float32).astype(jnp.bfloat16)
    anc = jax.random.randint(k_anc, (B,), 0, n_nodes, dtype=jnp.int32)
    pos = jax.random.randint(k_pos, (B, P), 0, n_nodes, dtype=jnp.int32)
    neg = jax.random.randint(k_neg, (B, Nn), 0, n_nodes, dtype=jnp.int32)

    loss = jax.block_until_ready(triplet_bce_forward(embed_table, anc, pos, neg))
    loss_ref = jax.block_until_ready(
        triplet_bce_forward_ref(embed_table, anc, pos, neg))
    assert abs(float(loss) - float(loss_ref)) < 1e-3, (float(loss), float(loss_ref))

    print("KERNEL_OK")
</pallas_src>

<mosaic_0001>
module attributes {stable_mosaic.version = 11 : i64} {
  func.func @_triplet_bce_kernel(%arg0: i32, %arg1: i32, %arg2: memref<2xi32, #tpu.memory_space<smem>>, %arg3: memref<16x32xbf16, #tpu.memory_space<vmem>>, %arg4: memref<16x256xbf16, #tpu.memory_space<vmem>>, %arg5: memref<32x256xbf16, #tpu.memory_space<vmem>>, %arg6: memref<256x8xbf16, #tpu.memory_space<vmem>>, %arg7: memref<1x1xf32, #tpu.memory_space<vmem>>, %arg8: memref<16x8xf32, #tpu.memory_space<vmem>>) attributes {dimension_semantics = [#tpu.dimension_semantics<arbitrary>, #tpu.dimension_semantics<arbitrary>], iteration_bounds = array<i64: 1, 1>, scalar_prefetch = 1 : i64, scratch_operands = 1 : i64, tpu.core_type = #tpu.core_type<tc>, window_params = [{transform_indices = @transform_0, window_bounds = array<i64: 16, 32>}, {transform_indices = @transform_1, window_bounds = array<i64: 16, 256>}, {pipeline_mode = #tpu.pipeline_mode<synchronous>, transform_indices = @transform_2, window_bounds = array<i64: 32, 256>}, {pipeline_mode = #tpu.pipeline_mode<synchronous>, transform_indices = @transform_3, window_bounds = array<i64: 256, 8>}, {transform_indices = @transform_4, window_bounds = array<i64: 1, 1>}]} {
    %c0_i32 = arith.constant 0 : i32
    %0 = arith.cmpi eq, %arg1, %c0_i32 : i32
    %1 = arith.extui %0 : i1 to i32
    %c0_i32_0 = arith.constant 0 : i32
    %2 = arith.cmpi ne, %1, %c0_i32_0 : i32
    scf.if %2 {
      %cst_17 = arith.constant 0.000000e+00 : f32
      %41 = vector.broadcast %cst_17 : f32 to vector<16x8xf32>
      %c0_18 = arith.constant 0 : index
      %c0_19 = arith.constant 0 : index
      %42 = vector.load %arg8[%c0_18, %c0_19] : memref<16x8xf32, #tpu.memory_space<vmem>>, vector<16x8xf32>
      tpu.vector_store %arg8[%c0_18, %c0_19], %41 {strides = array<i32>} : memref<16x8xf32, #tpu.memory_space<vmem>>, vector<16x8xf32>,
    } else {
    }
    %c0 = arith.constant 0 : index
    %3 = memref.load %arg2[%c0] : memref<2xi32, #tpu.memory_space<smem>>
    %c1 = arith.constant 1 : index
    %4 = memref.load %arg2[%c1] : memref<2xi32, #tpu.memory_space<smem>>
    %c0_1 = arith.constant 0 : index
    %c0_2 = arith.constant 0 : index
    %5 = vector.load %arg3[%c0_1, %c0_2] : memref<16x32xbf16, #tpu.memory_space<vmem>>, vector<16x32xbf16>
    %c0_3 = arith.constant 0 : index
    %c0_4 = arith.constant 0 : index
    %6 = vector.load %arg4[%c0_3, %c0_4] : memref<16x256xbf16, #tpu.memory_space<vmem>>, vector<16x256xbf16>
    %c0_5 = arith.constant 0 : index
    %c0_6 = arith.constant 0 : index
    %7 = vector.load %arg5[%c0_5, %c0_6] : memref<32x256xbf16, #tpu.memory_space<vmem>>, vector<32x256xbf16>
    %cst = arith.constant dense<0.000000e+00> : vector<16x256xf32>
    %8 = tpu.matmul %5, %7, %cst {dimension_numbers = #tpu.dot_dimension_numbers<[1], [0], [0], [1], [0, 0, 1, 1], [], []>} : vector<16x32xbf16>, vector<32x256xbf16>, vector<16x256xf32> -> vector<16x256xf32>
    %9 = arith.truncf %8 : vector<16x256xf32> to vector<16x256xbf16>
    %10 = arith.mulf %6, %9 : vector<16x256xbf16>
    %c0_7 = arith.constant 0 : index
    %c0_8 = arith.constant 0 : index
    %11 = vector.load %arg6[%c0_7, %c0_8] : memref<256x8xbf16, #tpu.memory_space<vmem>>, vector<256x8xbf16>
    %cst_9 = arith.constant dense<0.000000e+00> : vector<16x8xf32>
    %12 = tpu.matmul %10, %11, %cst_9 {dimension_numbers = #tpu.dot_dimension_numbers<[1], [0], [0], [1], [0, 0, 1, 1], [], []>} : vector<16x256xbf16>, vector<256x8xbf16>, vector<16x8xf32> -> vector<16x8xf32>
    %13 = tpu.iota {dimensions = array<i32: 1>} : vector<16x8xi32>
    %14 = vector.broadcast %3 : i32 to vector<16x8xi32>
    %15 = arith.cmpi slt, %13, %14 : vector<16x8xi32>
    %16 = arith.extui %15 : vector<16x8xi1> to vector<16x8xi32>
    %17 = arith.sitofp %16 : vector<16x8xi32> to vector<16x8xf32>
    %cst_10 = arith.constant 0.000000e+00 : f32
    %18 = vector.broadcast %cst_10 : f32 to vector<16x8xf32>
    %19 = arith.maximumf %12, %18 : vector<16x8xf32>
    %20 = arith.mulf %12, %17 : vector<16x8xf32>
    %21 = arith.subf %19, %20 : vector<16x8xf32>
    %22 = math.absf %12 : vector<16x8xf32>
    %cst_11 = arith.constant 0.000000e+00 : f32
    %23 = vector.broadcast %cst_11 : f32 to vector<16x8xf32>
    %24 = arith.subf %23, %22 : vector<16x8xf32>
    %25 = math.exp %24 : vector<16x8xf32>
    %26 = math.log1p %25 : vector<16x8xf32>
    %27 = arith.addf %21, %26 : vector<16x8xf32>
    %c1_i32 = arith.constant 1 : i32
    %28 = arith.muli %arg0, %c1_i32 : i32
    %29 = arith.addi %28, %arg1 : i32
    %c16_i32 = arith.constant 16 : i32
    %30 = arith.muli %29, %c16_i32 : i32
    %c16_i32_12 = arith.constant 16 : i32
    %31 = arith.addi %30, %c16_i32_12 : i32
    %32 = arith.cmpi sle, %31, %4 : i32
    %33 = arith.extui %32 : i1 to i32
    %c0_i32_13 = arith.constant 0 : i32
    %34 = arith.cmpi ne, %33, %c0_i32_13 : i32
    scf.if %34 {
      %c0_17 = arith.constant 0 : index
      %c0_18 = arith.constant 0 : index
      %41 = vector.load %arg8[%c0_17, %c0_18] : memref<16x8xf32, #tpu.memory_space<vmem>>, vector<16x8xf32>
      %42 = arith.addf %41, %27 : vector<16x8xf32>
      %c0_19 = arith.constant 0 : index
      %c0_20 = arith.constant 0 : index
      %43 = vector.load %arg8[%c0_19, %c0_20] : memref<16x8xf32, #tpu.memory_space<vmem>>, vector<16x8xf32>
      tpu.vector_store %arg8[%c0_19, %c0_20], %42 {strides = array<i32>} : memref<16x8xf32, #tpu.memory_space<vmem>>, vector<16x8xf32>,
    } else {
    }
    %true = arith.constant true
    %35 = arith.xori %32, %true : i1
    %36 = arith.extui %35 : i1 to i32
    %c0_i32_14 = arith.constant 0 : i32
    %37 = arith.cmpi ne, %36, %c0_i32_14 : i32
    scf.if %37 {
      %41 = tpu.iota {dimensions = array<i32: 0>} : vector<16x8xi32>
      %42 = vector.broadcast %30 : i32 to vector<16x8xi32>
      %43 = arith.addi %42, %41 : vector<16x8xi32>
      %c0_17 = arith.constant 0 : index
      %c0_18 = arith.constant 0 : index
      %44 = vector.load %arg8[%c0_17, %c0_18] : memref<16x8xf32, #tpu.memory_space<vmem>>, vector<16x8xf32>
      %45 = vector.broadcast %4 : i32 to vector<16x8xi32>
      %46 = arith.cmpi slt, %43, %45 : vector<16x8xi32>
      %cst_19 = arith.constant 0.000000e+00 : f32
      %47 = vector.broadcast %cst_19 : f32 to vector<16x8xf32>
      %48 = arith.select %46, %27, %47 : vector<16x8xi1>, vector<16x8xf32>
      %49 = arith.addf %44, %48 : vector<16x8xf32>
      %c0_20 = arith.constant 0 : index
      %c0_21 = arith.constant 0 : index
      %50 = vector.load %arg8[%c0_20, %c0_21] : memref<16x8xf32, #tpu.memory_space<vmem>>, vector<16x8xf32>
      tpu.vector_store %arg8[%c0_20, %c0_21], %49 {strides = array<i32>} : memref<16x8xf32, #tpu.memory_space<vmem>>, vector<16x8xf32>,
    } else {
    }
    %c0_i32_15 = arith.constant 0 : i32
    %38 = arith.cmpi eq, %arg1, %c0_i32_15 : i32
    %39 = arith.extui %38 : i1 to i32
    %c0_i32_16 = arith.constant 0 : i32
    %40 = arith.cmpi ne, %39, %c0_i32_16 : i32
    scf.if %40 {
      %c0_17 = arith.constant 0 : index
      %c0_18 = arith.constant 0 : index
      %41 = vector.load %arg8[%c0_17, %c0_18] : memref<16x8xf32, #tpu.memory_space<vmem>>, vector<16x8xf32>
      %42 = vector.shape_cast %41 : vector<16x8xf32> to vector<1x16x8xf32>
      %cst_19 = arith.constant dense<0.000000e+00> : vector<1xf32>
      %43 = vector.multi_reduction <add>, %42, %cst_19 [1, 2] : vector<1x16x8xf32> to vector<1xf32>
      %44 = vector.shape_cast %43 : vector<1xf32> to vector<1x1x1xf32>
      %45 = vector.extract %44[0, 0, 0] : f32 from vector<1x1x1xf32>
      %46 = vector.broadcast %45 : f32 to vector<1x1xf32>
      %c0_20 = arith.constant 0 : index
      %c0_21 = arith.constant 0 : index
      %47 = vector.load %arg7[%c0_20, %c0_21] : memref<1x1xf32, #tpu.memory_space<vmem>>, vector<1x1xf32>
      tpu.vector_store %arg7[%c0_20, %c0_21], %46 {strides = array<i32>} : memref<1x1xf32, #tpu.memory_space<vmem>>, vector<1x1xf32>,
    } else {
    }
    return
  }
  func.func @transform_0(%arg0: i32, %arg1: i32, %arg2: memref<2xi32, #tpu.memory_space<smem>>) -> (i32, i32) {
    %c1_i32 = arith.constant 1 : i32
    %0 = arith.muli %arg0, %c1_i32 : i32
    %1 = arith.addi %0, %arg1 : i32
    %c0_i32 = arith.constant 0 : i32
    %c0_i32_0 = arith.constant 0 : i32
    return %1, %c0_i32 : i32, i32
  }
  func.func @transform_1(%arg0: i32, %arg1: i32, %arg2: memref<2xi32, #tpu.memory_space<smem>>) -> (i32, i32) {
    %c1_i32 = arith.constant 1 : i32
    %0 = arith.muli %arg0, %c1_i32 : i32
    %1 = arith.addi %0, %arg1 : i32
    %c0_i32 = arith.constant 0 : i32
    %c0_i32_0 = arith.constant 0 : i32
    return %1, %c0_i32 : i32, i32
  }
  func.func @transform_2(%arg0: i32, %arg1: i32, %arg2: memref<2xi32, #tpu.memory_space<smem>>) -> (i32, i32) {
    %c0_i32 = arith.constant 0 : i32
    %c0_i32_0 = arith.constant 0 : i32
    %c0_i32_1 = arith.constant 0 : i32
    return %c0_i32, %c0_i32_0 : i32, i32
  }
  func.func @transform_3(%arg0: i32, %arg1: i32, %arg2: memref<2xi32, #tpu.memory_space<smem>>) -> (i32, i32) {
    %c0_i32 = arith.constant 0 : i32
    %c0_i32_0 = arith.constant 0 : i32
    %c0_i32_1 = arith.constant 0 : i32
    return %c0_i32, %c0_i32_0 : i32, i32
  }
  func.func @transform_4(%arg0: i32, %arg1: i32, %arg2: memref<2xi32, #tpu.memory_space<smem>>) -> (i32, i32) {
    %c0_i32 = arith.constant 0 : i32
    %c0_i32_0 = arith.constant 0 : i32
    return %arg0, %c0_i32 : i32, i32
  }
}

</mosaic_0001>

<llo_original>
// kernel: tpu_custom_call.1
$region0: #{tpu_custom_call.1}
  #allocation0 [shape = 'u32[]', space=smem, size = 0x4, offset = 0x4, fixed_abs, tag = 'smem constant byte address 0x4 - core index']
  #allocation1 [shape = 'u32[144,128]{1,0:T(1,128)}', space=vmem, size = 0x12000, scoped, tag = 'internal scratch']
  #allocation2 [shape = 'f32[16,8]{1,0:T(8,128)}', space=vmem, size = 0x2000, scoped, tag = 'scratch operand']
  #allocation3 [shape = 's32[1]{0}', space=sflag, size = 0x4, scoped, tag = 'scoped memory for tpu_custom_call.1']
  #allocation4 [shape = 'u8[512]{0}', space=smem, size = 0x200, scoped, tag = 'prefetched SMEM operand 0']
  %s0 = inlined_call_operand.vmem [shape: s32[2], index: 0, kind: input, shape index: {}]
  %s1 = inlined_call_operand.vmem [shape: bf16[16,32], index: 1, kind: input, shape index: {}]
  %s2 = inlined_call_operand.vmem [shape: bf16[16,256], index: 2, kind: input, shape index: {}]
  %s3 = inlined_call_operand.vmem [shape: bf16[32,256], index: 3, kind: input, shape index: {}]
  %s4 = inlined_call_operand.vmem [shape: bf16[256,8], index: 4, kind: input, shape index: {}]
  %s5 = inlined_call_operand.hbm [shape: f32[1,1], index: 5, kind: output, shape index: {}]
  %s6 = sld [smem:[#allocation0]]
  $region42: #{tpu_custom_call.1} parent=0
    _
  %s8 = ssub.s32 1, %s6
  %s9 = scalar_select 0, %s8, %s6
  %s10 = sshll.u32 %s0, 4
  %s11 = int_to_ptr.vmem [resolvable:$true] %s10
  %13 = dma.vmem_to_smem %s11, 16, [#allocation4], [#allocation3]
  %14 = dma.done [#allocation3], 16
  %15 = sfence
  $region1: #{tpu_custom_call.1} parent=0
    #allocation5 [shape = 'u8[512]{0}', space=vmem, size = 0x400, scoped, tag = 'output window, operand 0, single buffered']
    #allocation6 [shape = 's32[1]{0}', space=sflag, size = 0x4, scoped, tag = 'scoped memory for tpu_custom_call.1']
    %16 = vsyncpa [#allocation6], 0
    // Predicated region
    $region2: #{tpu_custom_call.1} parent=1 // pred_check
      _
    $region3: #{tpu_custom_call.1} parent=1 // pred_check_branch
      %18 = sbr.rel (0) target = $region5
    $region4: #{tpu_custom_call.1} parent=1 // pred_region
      %s19 = sadd.s32 0, 0
      %s20 = smul.u32 2, %s19
      %p21 = scmp.lt.s32.totalorder %s20, 1
      %s22 = scalar_select %p21, %s20, 1
      %s23 = smul.addr %s22, 4
      %s24 = scalar_lea.vmem %s1, %s23
      %s25 = sadd.s32 0, 0
      %s26 = smul.u32 2, %s25
    $region5: #{tpu_custom_call.1} parent=1 // pred_fallthru
      _
    // Predicated region
    $region6: #{tpu_custom_call.1} parent=1 // pred_check
      _
    $region7: #{tpu_custom_call.1} parent=1 // pred_check_branch
      %28 = sbr.rel (0) target = $region9
    $region8: #{tpu_custom_call.1} parent=1 // pred_region
      %s29 = sadd.s32 0, 0
      %s30 = smul.u32 2, %s29
      %p31 = scmp.lt.s32.totalorder %s30, 1
      %s32 = scalar_select %p31, %s30, 1
      %s33 = smul.addr %s32, 2
      %s34 = smul.addr %s33, 4
      %s35 = scalar_lea.vmem %s2, %s34
      %s36 = sadd.s32 0, 0
      %s37 = smul.u32 2, %s36
    $region9: #{tpu_custom_call.1} parent=1 // pred_fallthru
      _
    // Predicated region
    $region10: #{tpu_custom_call.1} parent=1 // pred_check
      _
    $region11: #{tpu_custom_call.1} parent=1 // pred_check_branch
      %39 = sbr.rel (0) target = $region13
    $region12: #{tpu_custom_call.1} parent=1 // pred_region
      _
    $region13: #{tpu_custom_call.1} parent=1 // pred_fallthru
      _
    // Predicated region
    $region14: #{tpu_custom_call.1} parent=1 // pred_check
      _
    $region15: #{tpu_custom_call.1} parent=1 // pred_check_branch
      %41 = sbr.rel (0) target = $region17
    $region16: #{tpu_custom_call.1} parent=1 // pred_region
      _
    $region17: #{tpu_custom_call.1} parent=1 // pred_fallthru
      _
    %s42 = sadd.s32 0, 0
    %s43 = smul.u32 2, %s42
    %p44 = scmp.lt.s32.totalorder %s43, 1
    %s45 = scalar_select %p44, %s43, 1
    %s46 = smul.addr %s45, 4
    %s47 = scalar_lea.vmem %s1, %s46
    %s48 = sadd.s32 0, 0
    %s49 = smul.u32 2, %s48
    %p50 = scmp.lt.s32.totalorder %s49, 1
    %s51 = scalar_select %p50, %s49, 1
    %s52 = smul.addr %s51, 2
    %s53 = smul.addr %s52, 4
    %s54 = scalar_lea.vmem %s2, %s53
    %s55 = sadd.s32 0, 0
    %s56 = smul.u32 2, %s55
    %p57 = scmp.lt.s32.totalorder %s56, 1
    %s58 = scalar_select %p57, %s56, 1
    %s59 = smul.addr %s58, 4
    %s60 = scalar_lea.vmem %s1, %s59
    %s61 = sadd.s32 0, 0
    %s62 = smul.u32 2, %s61
    %s63 = sadd.s32 0, 0
    %s64 = smul.u32 2, %s63
    %p65 = scmp.lt.s32.totalorder %s64, 1
    %s66 = scalar_select %p65, %s64, 1
    %s67 = smul.addr %s66, 2
    %s68 = smul.addr %s67, 4
    %s69 = scalar_lea.vmem %s2, %s68
    %s70 = sadd.s32 0, 0
    %s71 = smul.u32 2, %s70
    %p73 = scmp.eq.s32.totalorder 0, 0
    // Predicated region
    $region18: #{tpu_custom_call.1} parent=1 // pred_check
      %p74 = pneg %p73
    $region19: #{tpu_custom_call.1} parent=1 // pred_check_branch
      %76 = sbr.rel (%p74) target = $region21
    $region20: #{tpu_custom_call.1} parent=1 // pred_region
      %vm77 = vcmask 64512
      %78 = vst.msk [vmem:[#allocation2] sm:$0xff] %vm77, 0.0
      %79 = vst.msk [vmem:[#allocation2 + $0x8] sm:$0xff] %vm77, 0.0
    $region21: #{tpu_custom_call.1} parent=1 // pred_fallthru
      _
    %s80 = sld [smem:[#allocation4]]
    %s81 = sld [smem:[#allocation4 + $0x1]]
    %v82 = vld [vmem:[%s60] sm:$0xf]
    %v83 = vld [vmem:[%s60 + $0x4] sm:$0xf]
    %v84 = vld [vmem:[%s69] sm:$0xff]
    %v85 = vld [vmem:[%s69 + $0x8] sm:$0xff]
    %v86 = vld [vmem:[%s3] sm:$0xff]
    %v87 = vld [vmem:[%s3 + $0x8] sm:$0xff]
    %v88 = vld [vmem:[%s3 + $0x10] sm:$0xff]
    %v89 = vld [vmem:[%s3 + $0x18] sm:$0xff]
    %v92 = vunpack.c.l.b16 %v82
    %v93 = vunpack.c.l.b16 %v83
    %v94 = vpack.c.b16 %v93, %v92
    %v99 = vunpack.c.l.b16 %v86
    %v100 = vunpack.c.h.b16 %v86
    %v101 = vunpack.c.l.b16 %v87
    %v102 = vunpack.c.h.b16 %v87
    %v103 = vunpack.c.l.b16 %v88
    %v104 = vunpack.c.h.b16 %v88
    %v105 = vunpack.c.l.b16 %v89
    %v106 = vunpack.c.h.b16 %v89
    %v107 = vpack.c.b16 %v101, %v99
    %v108 = vpack.c.b16 %v102, %v100
    %v109 = vpack.c.b16 %v105, %v103
    %v110 = vpack.c.b16 %v106, %v104
    %vm115 = vcmask 261120
    %v117 = vsel %vm115, %v94, 0
    %119 = vmatprep.subr.bf16.mxu0 %v108
    %120 = vmatpush1.bf16.msra.mxu0 %v107
    %121 = vmatprep.subr.bf16.mxu0 %v110
    %122 = vmatpush1.bf16.msra.mxu0 %v109
    %123 = vmatprep.subr.bf16.mxu0 0
    %124 = vmatpush1.bf16.msra.mxu0 0
    %125 = vmatprep.subr.bf16.mxu0 0
    %126 = vmatpush1.bf16.msra.mxu0 0
    %127 = vmatprep.subr.bf16.mxu0 0
    %128 = vmatpush1.bf16.msra.mxu0 0
    %129 = vmatprep.subr.bf16.mxu0 0
    %130 = vmatpush1.bf16.msra.mxu0 0
    %131 = vmatprep.subr.bf16.mxu0 0
    %132 = vmatpush1.bf16.msra.mxu0 0
    %133 = vmatprep.subr.bf16.mxu0 0
    %134 = vmatpush1.bf16.msra.mxu0 0
    %135 = vmatprep.subr.bf16.mxu0 0
    %136 = vmatpush1.bf16.msra.mxu0 0
    %137 = vmatprep.subr.bf16.mxu0 0
    %138 = vmatpush1.bf16.msra.mxu0 0
    %139 = vmatprep.subr.bf16.mxu0 0
    %140 = vmatpush1.bf16.msra.mxu0 0
    %141 = vmatprep.subr.bf16.mxu0 0
    %142 = vmatpush1.bf16.msra.mxu0 0
    %143 = vmatprep.subr.bf16.mxu0 0
    %144 = vmatpush1.bf16.msra.mxu0 0
    %145 = vmatprep.subr.bf16.mxu0 0
    %146 = vmatpush1.bf16.msra.mxu0 0
    %147 = vmatprep.subr.bf16.mxu0 0
    %148 = vmatpush1.bf16.msra.mxu0 0
    %149 = vmatprep.subr.bf16.mxu0 0
    %150 = vmatpush1.bf16.msra.mxu0 0
    %151 = vmatprep.mubr.bf16.mxu0 0
    %152 = vmatmul.mubr.bf16.gmra.mrb[0].mxu0 %v117
    %v153 = vpop.f32.mrb[0].mxu0
    %v154 = vadd.f32 0.0, %v153
    %v155 = vpop.f32.mrb[0].mxu0
    %v156 = vadd.f32 0.0, %v155
    %v157 = vpop.f32.mrb[0].mxu0
    %v158 = vadd.f32 0.0, %v157
    %v159 = vpop.f32.mrb[0].mxu0
    %v160 = vadd.f32 0.0, %v159
    %161 = vdwg.mxu0
    %v162 = vpack.c.bf16 %v158, %v154
    %v163 = vpack.c.bf16 %v160, %v156
    %v166 = vunpack.c.l.b16 %v162
    %v167 = vunpack.c.l.b16 %v163
    %v168 = vunpack.c.h.b16 %v162
    %v169 = vunpack.c.h.b16 %v163
    %v170 = vpack.c.b16 %v167, %v166
    %v171 = vpack.c.b16 %v169, %v168
    %v174 = vmul.bf16 %v84, %v170
    %v175 = vmul.bf16 %v85, %v171
    %v176 = vld [vmem:[%s4] sm:$0xf]
    %v177 = vld [vmem:[%s4 + $0x4] sm:$0xf]
    %v178 = vld [vmem:[%s4 + $0x8] sm:$0xf]
    %v179 = vld [vmem:[%s4 + $0xc] sm:$0xf]
    %v180 = vld [vmem:[%s4 + $0x10] sm:$0xf]
    %v181 = vld [vmem:[%s4 + $0x14] sm:$0xf]
    %v182 = vld [vmem:[%s4 + $0x18] sm:$0xf]
    %v183 = vld [vmem:[%s4 + $0x1c] sm:$0xf]
    %v184 = vld [vmem:[%s4 + $0x20] sm:$0xf]
    %v185 = vld [vmem:[%s4 + $0x24] sm:$0xf]
    %v186 = vld [vmem:[%s4 + $0x28] sm:$0xf]
    %v187 = vld [vmem:[%s4 + $0x2c] sm:$0xf]
    %v188 = vld [vmem:[%s4 + $0x30] sm:$0xf]
    %v189 = vld [vmem:[%s4 + $0x34] sm:$0xf]
    %v190 = vld [vmem:[%s4 + $0x38] sm:$0xf]
    %v191 = vld [vmem:[%s4 + $0x3c] sm:$0xf]
    %v192 = vld [vmem:[%s4 + $0x40] sm:$0xf]
    %v193 = vld [vmem:[%s4 + $0x44] sm:$0xf]
    %v194 = vld [vmem:[%s4 + $0x48] sm:$0xf]
    %v195 = vld [vmem:[%s4 + $0x4c] sm:$0xf]
    %v196 = vld [vmem:[%s4 + $0x50] sm:$0xf]
    %v197 = vld [vmem:[%s4 + $0x54] sm:$0xf]
    %v198 = vld [vmem:[%s4 + $0x58] sm:$0xf]
    %v199 = vld [vmem:[%s4 + $0x5c] sm:$0xf]
    %v200 = vld [vmem:[%s4 + $0x60] sm:$0xf]
    %v201 = vld [vmem:[%s4 + $0x64] sm:$0xf]
    %v202 = vld [vmem:[%s4 + $0x68] sm:$0xf]
    %v203 = vld [vmem:[%s4 + $0x6c] sm:$0xf]
    %v204 = vld [vmem:[%s4 + $0x70] sm:$0xf]
    %v205 = vld [vmem:[%s4 + $0x74] sm:$0xf]
    %v206 = vld [vmem:[%s4 + $0x78] sm:$0xf]
    %v207 = vld [vmem:[%s4 + $0x7c] sm:$0xf]
    %v210 = vunpack.c.l.b16 %v174
    %v211 = vunpack.c.h.b16 %v174
    %v212 = vunpack.c.l.b16 %v175
    %v213 = vunpack.c.h.b16 %v175
    %v214 = vpack.c.b16 %v212, %v210
    %v215 = vpack.c.b16 %v213, %v211
    %v250 = vunpack.c.l.b16 %v176
    %v251 = vunpack.c.l.b16 %v177
    %v252 = vunpack.c.l.b16 %v178
    %v253 = vunpack.c.l.b16 %v179
    %v254 = vunpack.c.l.b16 %v180
    %v255 = vunpack.c.l.b16 %v181
    %v256 = vunpack.c.l.b16 %v182
    %v257 = vunpack.c.l.b16 %v183
    %v258 = vunpack.c.l.b16 %v184
    %v259 = vunpack.c.l.b16 %v185
    %v260 = vunpack.c.l.b16 %v186
    %v261 = vunpack.c.l.b16 %v187
    %v262 = vunpack.c.l.b16 %v188
    %v263 = vunpack.c.l.b16 %v189
    %v264 = vunpack.c.l.b16 %v190
    %v265 = vunpack.c.l.b16 %v191
    %v266 = vunpack.c.l.b16 %v192
    %v267 = vunpack.c.l.b16 %v193
    %v268 = vunpack.c.l.b16 %v194
    %v269 = vunpack.c.l.b16 %v195
    %v270 = vunpack.c.l.b16 %v196
    %v271 = vunpack.c.l.b16 %v197
    %v272 = vunpack.c.l.b16 %v198
    %v273 = vunpack.c.l.b16 %v199
    %v274 = vunpack.c.l.b16 %v200
    %v275 = vunpack.c.l.b16 %v201
    %v276 = vunpack.c.l.b16 %v202
    %v277 = vunpack.c.l.b16 %v203
    %v278 = vunpack.c.l.b16 %v204
    %v279 = vunpack.c.l.b16 %v205
    %v280 = vunpack.c.l.b16 %v206
    %v281 = vunpack.c.l.b16 %v207
    %v282 = vpack.c.b16 %v251, %v250
    %v283 = vpack.c.b16 %v253, %v252
    %v284 = vpack.c.b16 %v255, %v254
    %v285 = vpack.c.b16 %v257, %v256
    %v286 = vpack.c.b16 %v259, %v258
    %v287 = vpack.c.b16 %v261, %v260
    %v288 = vpack.c.b16 %v263, %v262
    %v289 = vpack.c.b16 %v265, %v264
    %v290 = vpack.c.b16 %v267, %v266
    %v291 = vpack.c.b16 %v269, %v268
    %v292 = vpack.c.b16 %v271, %v270
    %v293 = vpack.c.b16 %v273, %v272
    %v294 = vpack.c.b16 %v275, %v274
    %v295 = vpack.c.b16 %v277, %v276
    %v296 = vpack.c.b16 %v279, %v278
    %v297 = vpack.c.b16 %v281, %v280
    %314 = vmatprep.subr.bf16.mxu0 0
    %315 = vmatpush1.bf16.msra.mxu0 %v282
    %316 = vmatprep.subr.bf16.mxu0 0
    %317 = vmatpush1.bf16.msra.mxu0 %v283
    %318 = vmatprep.subr.bf16.mxu0 0
    %319 = vmatpush1.bf16.msra.mxu0 %v284
    %320 = vmatprep.subr.bf16.mxu0 0
    %321 = vmatpush1.bf16.msra.mxu0 %v285
    %322 = vmatprep.subr.bf16.mxu0 0
    %323 = vmatpush1.bf16.msra.mxu0 %v286
    %324 = vmatprep.subr.bf16.mxu0 0
    %325 = vmatpush1.bf16.msra.mxu0 %v287
    %326 = vmatprep.subr.bf16.mxu0 0
    %327 = vmatpush1.bf16.msra.mxu0 %v288
    %328 = vmatprep.subr.bf16.mxu0 0
    %329 = vmatpush1.bf16.msra.mxu0 %v289
    %330 = vmatprep.subr.bf16.mxu0 0
    %331 = vmatpush1.bf16.msra.mxu0 %v290
    %332 = vmatprep.subr.bf16.mxu0 0
    %333 = vmatpush1.bf16.msra.mxu0 %v291
    %334 = vmatprep.subr.bf16.mxu0 0
    %335 = vmatpush1.bf16.msra.mxu0 %v292
    %336 = vmatprep.subr.bf16.mxu0 0
    %337 = vmatpush1.bf16.msra.mxu0 %v293
    %338 = vmatprep.subr.bf16.mxu0 0
    %339 = vmatpush1.bf16.msra.mxu0 %v294
    %340 = vmatprep.subr.bf16.mxu0 0
    %341 = vmatpush1.bf16.msra.mxu0 %v295
    %342 = vmatprep.subr.bf16.mxu0 0
    %343 = vmatpush1.bf16.msra.mxu0 %v296
    %344 = vmatprep.subr.bf16.mxu0 0
    %345 = vmatpush1.bf16.msra.mxu0 %v297
    %346 = vmatprep.mubr.bf16.mxu0 %v215
    %347 = vmatmul.mubr.bf16.gmra.mrb[0].mxu0 %v214
    %v348 = vpop.f32.mrb[0].mxu0
    %v349 = vadd.f32 0.0, %v348
    %v350 = vpop.f32.mrb[0].mxu0
    %v351 = vpop.f32.mrb[0].mxu0
    %v352 = vadd.f32 0.0, %v351
    %v353 = vpop.f32.mrb[0].mxu0
    %354 = vdwg.mxu0
    %v355 = vlaneseq
    %v356 = vand.u32 %v355, 127
    %v357 = vstv %s80
    %vm358 = vcmp.lt.s32.totalorder %v356, %v357
    %v359 = vsel %vm358, 1, 0
    %v360 = vcvt.s32.f32 %v359
    %v361 = vmax.f32 %v349, 0.0
    %v362 = vmax.f32 %v352, 0.0
    %v363 = vmul.f32 %v349, %v360
    %v364 = vmul.f32 %v352, %v360
    %v365 = vsub.f32 %v361, %v363
    %v366 = vsub.f32 %v362, %v364
    %v367 = vand.u32 2147483647, %v349
    %v368 = vand.u32 2147483647, %v352
    %v369 = vsub.f32 0.0, %v367
    %v370 = vsub.f32 0.0, %v368
    %v371 = vmul.f32 %v369, 1.442695
    %v372 = vpow.pop %v371
    %v373 = vmul.f32 %v370, 1.442695
    %v374 = vpow.pop %v373
    %v375 = vadd.f32 %v372, 1.0
    %v376 = vlog2.pop %v375
    %v377 = vmul.f32 %v376, 0.6931472
    %v378 = vmul.f32 -0.5, %v372
    %v379 = vadd.f32 %v378, 1.0
    %v380 = vmul.f32 %v379, %v372
    %v381 = vand.u32 2147483647, %v372
    %vm382 = vcmp.lt.f32.partialorder %v381, 0.0004427343
    %v383 = vsel %vm382, %v380, %v377
    %v384 = vadd.f32 %v374, 1.0
    %v385 = vlog2.pop %v384
    %v386 = vmul.f32 %v385, 0.6931472
    %v387 = vmul.f32 -0.5, %v374
    %v388 = vadd.f32 %v387, 1.0
    %v389 = vmul.f32 %v388, %v374
    %v390 = vand.u32 2147483647, %v374
    %vm391 = vcmp.lt.f32.partialorder %v390, 0.0004427343
    %v392 = vsel %vm391, %v389, %v386
    %v393 = vadd.f32 %v365, %v383
    %v394 = vadd.f32 %v366, %v392
    %s395 = sadd.s32 0, 0
    %s396 = smul.u32 %s395, 16
    %s397 = sadd.s32 %s396, 16
    %p398 = scmp.le.s32.totalorder %s397, %s81
    // Predicated region
    $region22: #{tpu_custom_call.1} parent=1 // pred_check
      %p399 = pneg %p398
    $region23: #{tpu_custom_call.1} parent=1 // pred_check_branch
      %401 = sbr.rel (%p399) target = $region25
    $region24: #{tpu_custom_call.1} parent=1 // pred_region
      %v402 = vld [vmem:[#allocation2] sm:$0xff]
      %v403 = vld [vmem:[#allocation2 + $0x8] sm:$0xff]
      %v404 = vadd.f32 %v402, %v393
      %v405 = vadd.f32 %v403, %v394
      %vm406 = vcmask 64512
      %407 = vst.msk [vmem:[#allocation2] sm:$0xff] %vm406, %v404
      %408 = vst.msk [vmem:[#allocation2 + $0x8] sm:$0xff] %vm406, %v405
    $region25: #{tpu_custom_call.1} parent=1 // pred_fallthru
      _
    %p409 = scmp.gt.s32.totalorder %s397, %s81
    // Predicated region
    $region26: #{tpu_custom_call.1} parent=1 // pred_check
      %p410 = pneg %p409
    $region27: #{tpu_custom_call.1} parent=1 // pred_check_branch
      %412 = sbr.rel (%p410) target = $region29
    $region28: #{tpu_custom_call.1} parent=1 // pred_region
      %v413 = vlaneseq
      %v414 = vshrl.u32 %v413, 7
      %v415 = vadd.s32 %v414, 8
      %v416 = vstv %s396
      %v417 = vadd.s32 %v416, %v414
      %v418 = vadd.s32 %v416, %v415
      %v419 = vld [vmem:[#allocation2] sm:$0xff]
      %v420 = vld [vmem:[#allocation2 + $0x8] sm:$0xff]
      %v421 = vstv %s81
      %vm422 = vcmp.lt.s32.totalorder %v417, %v421
      %vm423 = vcmp.lt.s32.totalorder %v418, %v421
      %v424 = vsel %vm422, %v393, 0.0
      %v425 = vsel %vm423, %v394, 0.0
      %v426 = vadd.f32 %v419, %v424
      %v427 = vadd.f32 %v420, %v425
      %vm428 = vcmask 64512
      %429 = vst.msk [vmem:[#allocation2] sm:$0xff] %vm428, %v426
      %430 = vst.msk [vmem:[#allocation2 + $0x8] sm:$0xff] %vm428, %v427
    $region29: #{tpu_custom_call.1} parent=1 // pred_fallthru
      _
    // Predicated region
    $region30: #{tpu_custom_call.1} parent=1 // pred_check
      %p431 = pneg %p73
    $region31: #{tpu_custom_call.1} parent=1 // pred_check_branch
      %433 = sbr.rel (%p431) target = $region33
    $region32: #{tpu_custom_call.1} parent=1 // pred_region
      %v434 = vld [vmem:[#allocation2] sm:$0xff]
      %v435 = vld [vmem:[#allocation2 + $0x8] sm:$0xff]
      %vm436 = vcmask 64512
      %v437 = vsel %vm436, %v434, 0.0
      %v438 = vsel %vm436, %v435, 0.0
      %v439 = vadd.f32 %v437, %v438
      %440 = vadd.xlane.f32.xlu0 %v439
      %v441 = vpop.xlane.xlu0 %440
      %v442 = vrot.slane %v441, 4
      %v443 = vadd.f32 %v441, %v442
      %v444 = vrot.slane %v443, 2
      %v445 = vadd.f32 %v443, %v444
      %v446 = vrot.slane %v445, 1
      %v447 = vadd.f32 %v445, %v446
      %s448 = vtos %v447
      %v449 = vstv %s448
      %vm450 = vcmask 0
      %451 = vst.msk [vmem:[#allocation5] sm:$0x1] %vm450, %v449
    $region33: #{tpu_custom_call.1} parent=1 // pred_fallthru
      _
    // Predicated region
    $region34: #{tpu_custom_call.1} parent=1 // pred_check
      _
    $region35: #{tpu_custom_call.1} parent=1 // pred_check_branch
      %453 = sbr.rel (0) target = $region37
    $region36: #{tpu_custom_call.1} parent=1 // pred_region
      %s455 = ssub.s32 16, 16
      %456 = vsyncadd [#allocation6], %s455
      %s458 = sshll.u32 [#allocation5], 4
      %s459 = int_to_ptr.vmem [resolvable:$true] %s458
      %461 = dma.vmem_to_hbm [thread:$0]  %s459, 16, %s5, [#allocation6]
    $region37: #{tpu_custom_call.1} parent=1 // pred_fallthru
      _
    // Predicated region
    $region38: #{tpu_custom_call.1} parent=1 // pred_check
      _
    $region39: #{tpu_custom_call.1} parent=1 // pred_check_branch
      %463 = sbr.rel (0) target = $region41
    $region40: #{tpu_custom_call.1} parent=1 // pred_region
      %464 = dma.done [#allocation6], 16
    $region41: #{tpu_custom_call.1} parent=1 // pred_fallthru
      _
    %465 = vsyncpa [#allocation6], 1

</llo_original>
